<compile_context>
chip_gen: v5e
topology: v5e:2x2
jax: 0.10.0
libtpu: 0.0.40
codegen_flags: <defaults>
</compile_context>

<pallas_src>
import jax
import jax.numpy as jnp
from jax.experimental import pallas as pl
from jax.experimental.pallas import tpu as pltpu


# -----------------------------------------------------------------------------
# Hardware-aware helpers (safe fallbacks if introspection is unavailable).
# -----------------------------------------------------------------------------
_SUBLANE = {4: 8, 2: 16, 1: 32}  # sublane multiple per itemsize (f32/bf16/int8)


def _round_up(a, m):
    return -(-a // m) * m


def _vmem_capacity_bytes():
    try:
        info = pltpu.get_tpu_info()
        for name in ("vmem_capacity_bytes", "vmem_size_bytes", "vmem_bytes"):
            v = getattr(info, name, None)
            if v:
                return int(v)
    except Exception:
        pass
    return 64 * 1024 * 1024  # conservative fallback: v7x per-TensorCore VMEM


def _vmem_budget_bytes():
    # ~15% headroom below physical VMEM for compiler-internal scratch:
    # ~108 MiB on v5e/v6e (128 MiB), ~54 MiB on v7x (64 MiB).
    return int(_vmem_capacity_bytes()) * 85 // 100


def _num_tensorcores():
    # Best effort; defaults to 1 (single-TC behaviour) if not reported.
    try:
        info = pltpu.get_tpu_info()
        for name in ("num_cores", "cores_per_chip", "num_tensorcores",
                     "tensorcores_per_chip"):
            v = getattr(info, name, None)
            if v:
                return int(v)
    except Exception:
        pass
    return 1


def _fused_vmem_need_bytes(C, D, N, dtype):
    """Estimate VMEM for one fused grid step: double-buffered in+out blocks
    (with dtype sublane / 128-lane padding) + small f32 (D, N) temps + slack."""
    it = jnp.dtype(dtype).itemsize
    sub = _SUBLANE.get(it, 8)
    block = C * _round_up(D, sub) * _round_up(N, 128) * it
    temps = 6 * _round_up(D, 8) * _round_up(N, 128) * 4
    return 4 * block + temps + (2 << 20)


# -----------------------------------------------------------------------------
# Fused single-pass kernel: one grid step per batch element, whole (C, D, H*W)
# slab in VMEM; squeeze + gate + scale in one HBM read/write of x.
# -----------------------------------------------------------------------------
def _se_fused_kernel(x_ref, w1t_ref, w2_ref, o_ref):
    # x_ref:   (1, C, D, N)  one batch element, native NCDHW with H*W on lanes
    # w1t_ref: (D, Dr)       fc1.weight transposed (contraction on sublanes)
    # w2_ref:  (D, Dr)       fc2.weight
    _, C, D, N = x_ref.shape
    floating = jnp.issubdtype(o_ref.dtype, jnp.floating)

    # --- squeeze: sum over C first (plain VPU adds on small (D, N) f32 temps;
    #     no full-slab f32 materialization), then ONE cross-lane reduce (XLU)
    #     over the (D, N) partial sum.
    s = x_ref[0, 0].astype(jnp.float32)                       # (D, N)
    for c in range(1, C):                                     # C is static
        s = s + x_ref[0, c].astype(jnp.float32)
    sq = jnp.sum(s, axis=1, keepdims=True) * (1.0 / (C * N))  # (D, 1)

    # --- excitation gate on VPU/EUP (no 1-column MXU matmuls, no relayouts):
    # fc1 + relu:  h1[0, j] = sum_d W1[j, d] * sq[d]
    h1 = jnp.sum(w1t_ref[...].astype(jnp.float32) * sq, axis=0, keepdims=True)  # (1, Dr)
    h1 = jnp.maximum(h1, 0.0)
    # fc2 + sigmoid:  g[i, 0] = sum_j W2[i, j] * h1[j]
    g = jax.nn.sigmoid(
        jnp.sum(w2_ref[...].astype(jnp.float32) * h1, axis=1, keepdims=True))   # (D, 1)

    # --- scale: per-C slice multiply in the input's native dtype (bf16 stays
    #     bf16 on v6e/v7x); broadcast gate over C (leading) and H*W (lanes).
    if floating:
        gc = g.astype(o_ref.dtype)
        for c in range(C):
            o_ref[0, c] = x_ref[0, c] * gc
    else:
        for c in range(C):
            o_ref[0, c] = (x_ref[0, c].astype(jnp.float32) * g).astype(o_ref.dtype)
    # TODO(synk): for very large static C, replace the unrolled Python loops
    # with pl.loop + a VMEM scratch accumulator to bound compile time.


def _se_fused(x4, w1, w2):
    B, C, D, N = x4.shape
    Dr = w1.shape[0]
    it = jnp.dtype(x4.dtype).itemsize
    w1t = jnp.transpose(w1)  # (D, Dr), tiny

    budget = _vmem_budget_bytes()
    cost = pl.CostEstimate(
        flops=2 * B * C * D * N + 4 * B * D * Dr,
        transcendentals=B * D,
        bytes_accessed=2 * B * C * D * N * it + 2 * D * Dr * 4,
    )

    return pl.pallas_call(
        _se_fused_kernel,
        out_shape=jax.ShapeDtypeStruct((B, C, D, N), x4.dtype),
        grid_spec=pltpu.PrefetchScalarGridSpec(
            num_scalar_prefetch=0,
            grid=(B,),
            in_specs=[
                pl.BlockSpec((1, C, D, N), lambda b: (b, 0, 0, 0)),
                pl.BlockSpec((D, Dr), lambda b: (0, 0)),
                pl.BlockSpec((D, Dr), lambda b: (0, 0)),
            ],
            out_specs=pl.BlockSpec((1, C, D, N), lambda b: (b, 0, 0, 0)),
        ),
        compiler_params=pltpu.CompilerParams(
            dimension_semantics=("parallel",),
            vmem_limit_bytes=budget,
        ),
        cost_estimate=cost,
    )(x4, w1t, w2)


# -----------------------------------------------------------------------------
# Two-pass fallback.
#   pass 1: (B, D) gate with f32-accumulating mean (exactly one read of x).
#   pass 2: sublane/lane-dense tiled scale kernel over the (B, C*D, N) view,
#           ~2 MiB blocks, many parallel grid steps (feeds both v7x cores).
# -----------------------------------------------------------------------------
def _compute_gate(x4, w1, w2):
    # f32-accumulating mean; avoids materializing a full f32 copy of x in HBM.
    sq = jnp.mean(x4, axis=(1, 3), dtype=jnp.float32)            # (B, D)
    h1 = jax.nn.relu(sq @ w1.T.astype(jnp.float32))              # (B, Dr)
    return jax.nn.sigmoid(h1 @ w2.T.astype(jnp.float32))         # (B, D)


def _se_scale_kernel(g_ref, x_ref, o_ref):
    # g_ref: (1, tr, 1) f32 per-row gate; x_ref/o_ref: (1, tr, tn)
    g = g_ref[0]                                                  # (tr, 1)
    x = x_ref[0]                                                  # (tr, tn)
    if jnp.issubdtype(o_ref.dtype, jnp.floating):
        o_ref[0] = x * g.astype(x.dtype)
    else:
        o_ref[0] = (x.astype(jnp.float32) * g).astype(o_ref.dtype)


def _choose_scale_tiles(R, N, itemsize, target_bytes=2 << 20):
    """Sublane-dense (multiple of 8/16/32) x lane-dense (multiple of 128 or
    full-N) blocks of roughly target_bytes."""
    sub = _SUBLANE.get(itemsize, 8)
    # Lane tile: keep the full lane axis (lane-dense stores) unless even one
    # sublane group at full width blows past the target.
    if N % 128 == 0 and sub * N * itemsize > target_bytes:
        tn = max(128, min(N, (target_bytes // (sub * itemsize)) // 128 * 128))
    else:
        tn = N
    # Row tile: multiple of the sublane count, ~target_bytes per block.
    rows = max(1, target_bytes // (tn * itemsize))
    if rows >= R or R <= sub:
        tr = R
    else:
        tr = max(sub, (rows // sub) * sub)
    return int(tr), int(tn)


def _se_scale(x4, gate):
    B, C, D, N = x4.shape
    R = C * D
    it = jnp.dtype(x4.dtype).itemsize

    x3 = x4.reshape(B, R, N)                                       # contiguous: free
    # row (c*D + d) uses gate[b, d]  ->  tile the (B, D) gate C times.
    g3 = jnp.tile(gate.astype(jnp.float32), (1, C)).reshape(B, R, 1)

    tr, tn = _choose_scale_tiles(R, N, it)
    grid = (B, pl.cdiv(R, tr), pl.cdiv(N, tn))

    budget = _vmem_budget_bytes()
    cost = pl.CostEstimate(
        flops=B * R * N,
        transcendentals=0,
        bytes_accessed=2 * B * R * N * it + B * R * 4,
    )

    out3 = pl.pallas_call(
        _se_scale_kernel,
        out_shape=jax.ShapeDtypeStruct((B, R, N), x4.dtype),
        grid_spec=pltpu.PrefetchScalarGridSpec(
            num_scalar_prefetch=0,
            grid=grid,
            in_specs=[
                pl.BlockSpec((1, tr, 1), lambda b, r, n: (b, r, 0)),
                pl.BlockSpec((1, tr, tn), lambda b, r, n: (b, r, n)),
            ],
            out_specs=pl.BlockSpec((1, tr, tn), lambda b, r, n: (b, r, n)),
        ),
        compiler_params=pltpu.CompilerParams(
            dimension_semantics=("parallel", "parallel", "parallel"),
            vmem_limit_bytes=budget,
        ),
        cost_estimate=cost,
    )(g3, x3)
    return out3.reshape(B, C, D, N)


# -----------------------------------------------------------------------------
# Public wrapper (native NCDHW, no transposes anywhere).
# -----------------------------------------------------------------------------
def se_layer_pallas(x, w1, w2, *, force_two_pass=False):
    """x: (B, C, D, H, W); w1: (D//r, D) = fc1.weight; w2: (D, D//r) = fc2.weight."""
    B, C, D, H, W = x.shape
    N = H * W
    x4 = x.reshape(B, C, D, N)              # contiguous reshape: free, no transpose

    budget = _vmem_budget_bytes()
    need = _fused_vmem_need_bytes(C, D, N, x.dtype)
    n_cores = _num_tensorcores()
    # On 2-TensorCore chips (v7x) a grid of (B,) with B < cores leaves a core
    # idle; the tiled two-pass path's (B, rows, lanes) grid shards across both.
    prefer_split = n_cores >= 2 and B < n_cores

    if (not force_two_pass) and (need <= budget) and (not prefer_split):
        out4 = _se_fused(x4, w1, w2)
    else:
        # Slab too big for (double-buffered) VMEM, or extra parallel grid
        # steps wanted: gate pass (one extra read of x) + lane-dense scale.
        gate = _compute_gate(x4, w1, w2)
        out4 = _se_scale(x4, gate)
    return out4.reshape(B, C, D, H, W)


# -----------------------------------------------------------------------------
# Pure-JAX reference mirroring the PyTorch forward.
# -----------------------------------------------------------------------------
def se_layer_ref(x, w1, w2):
    xp = jnp.transpose(x, (0, 2, 1, 3, 4))                   # (B, D, C, H, W)
    sq = jnp.mean(xp, axis=(2, 3, 4))                        # (B, D)
    h1 = jax.nn.relu(sq @ w1.T)                              # (B, D//r)
    g = jax.nn.sigmoid(h1 @ w2.T)                            # (B, D)
    out = xp * g[:, :, None, None, None]
    return jnp.transpose(out, (0, 2, 1, 3, 4))


if __name__ == "__main__":
    # num_channels (= D, the gated axis) = 8, reduction_ratio = 2.
    B, C, D, H, W = 2, 4, 8, 16, 16
    reduction_ratio = 2
    Dr = D // reduction_ratio

    key = jax.random.PRNGKey(0)
    kx, k1, k2 = jax.random.split(key, 3)
    x = jax.random.normal(kx, (B, C, D, H, W), dtype=jnp.float32)
    w1 = jax.random.normal(k1, (Dr, D), dtype=jnp.float32) * 0.3   # fc1.weight
    w2 = jax.random.normal(k2, (D, Dr), dtype=jnp.float32) * 0.3   # fc2.weight

    ref = se_layer_ref(x, w1, w2)

    # Fused single-pass path (default).
    fused_fn = jax.jit(se_layer_pallas)
    out = jax.block_until_ready(fused_fn(x, w1, w2))
    assert out.shape == (B, C, D, H, W)
    assert jnp.allclose(out, ref, atol=1e-5, rtol=1e-5)

    # Also exercise the two-pass fallback (used when a per-batch slab would
    # not fit VMEM, e.g. large C*D*H*W on v7x's 64 MiB, or for tiny B on
    # 2-TensorCore chips).
    twopass_fn = jax.jit(lambda a, b, c: se_layer_pallas(a, b, c, force_two_pass=True))
    out2 = jax.block_until_ready(twopass_fn(x, w1, w2))
    assert jnp.allclose(out2, ref, atol=1e-5, rtol=1e-5)

    print("KERNEL_OK")
</pallas_src>

<mosaic_0001>
module attributes {stable_mosaic.version = 11 : i64} {
  func.func @_se_fused_kernel(%arg0: i32, %arg1: memref<1x4x8x256xf32, #tpu.memory_space<vmem>>, %arg2: memref<8x4xf32, #tpu.memory_space<vmem>>, %arg3: memref<8x4xf32, #tpu.memory_space<vmem>>, %arg4: memref<1x4x8x256xf32, #tpu.memory_space<vmem>>) attributes {dimension_semantics = [#tpu.dimension_semantics<parallel>], iteration_bounds = array<i64: 2>, scalar_prefetch = 0 : i64, scratch_operands = 0 : i64, tpu.core_type = #tpu.core_type<tc>, window_params = [{transform_indices = @transform_0, window_bounds = array<i64: 1, 4, 8, 256>}, {pipeline_mode = #tpu.pipeline_mode<synchronous>, transform_indices = @transform_1, window_bounds = array<i64: 8, 4>}, {pipeline_mode = #tpu.pipeline_mode<synchronous>, transform_indices = @transform_2, window_bounds = array<i64: 8, 4>}, {transform_indices = @transform_3, window_bounds = array<i64: 1, 4, 8, 256>}]} {
    %c0 = arith.constant 0 : index
    %c0_0 = arith.constant 0 : index
    %c0_1 = arith.constant 0 : index
    %c0_2 = arith.constant 0 : index
    %0 = vector.load %arg1[%c0, %c0_0, %c0_1, %c0_2] : memref<1x4x8x256xf32, #tpu.memory_space<vmem>>, vector<1x1x8x256xf32>
    %1 = vector.shape_cast %0 : vector<1x1x8x256xf32> to vector<8x256xf32>
    %c0_3 = arith.constant 0 : index
    %c1 = arith.constant 1 : index
    %c0_4 = arith.constant 0 : index
    %c0_5 = arith.constant 0 : index
    %2 = vector.load %arg1[%c0_3, %c1, %c0_4, %c0_5] : memref<1x4x8x256xf32, #tpu.memory_space<vmem>>, vector<1x1x8x256xf32>
    %3 = vector.shape_cast %2 : vector<1x1x8x256xf32> to vector<8x256xf32>
    %4 = arith.addf %1, %3 : vector<8x256xf32>
    %c0_6 = arith.constant 0 : index
    %c2 = arith.constant 2 : index
    %c0_7 = arith.constant 0 : index
    %c0_8 = arith.constant 0 : index
    %5 = vector.load %arg1[%c0_6, %c2, %c0_7, %c0_8] : memref<1x4x8x256xf32, #tpu.memory_space<vmem>>, vector<1x1x8x256xf32>
    %6 = vector.shape_cast %5 : vector<1x1x8x256xf32> to vector<8x256xf32>
    %7 = arith.addf %4, %6 : vector<8x256xf32>
    %c0_9 = arith.constant 0 : index
    %c3 = arith.constant 3 : index
    %c0_10 = arith.constant 0 : index
    %c0_11 = arith.constant 0 : index
    %8 = vector.load %arg1[%c0_9, %c3, %c0_10, %c0_11] : memref<1x4x8x256xf32, #tpu.memory_space<vmem>>, vector<1x1x8x256xf32>
    %9 = vector.shape_cast %8 : vector<1x1x8x256xf32> to vector<8x256xf32>
    %10 = arith.addf %7, %9 : vector<8x256xf32>
    %cst = arith.constant dense<0.000000e+00> : vector<8xf32>
    %11 = vector.multi_reduction <add>, %10, %cst [1] : vector<8x256xf32> to vector<8xf32>
    %12 = vector.shape_cast %11 : vector<8xf32> to vector<8x1xf32>
    %cst_12 = arith.constant 9.765625E-4 : f32
    %13 = vector.broadcast %cst_12 : f32 to vector<8x1xf32>
    %14 = arith.mulf %12, %13 : vector<8x1xf32>
    %c0_13 = arith.constant 0 : index
    %c0_14 = arith.constant 0 : index
    %15 = vector.load %arg2[%c0_13, %c0_14] : memref<8x4xf32, #tpu.memory_space<vmem>>, vector<8x4xf32>
    %16 = vector.broadcast %14 : vector<8x1xf32> to vector<8x4xf32>
    %17 = arith.mulf %15, %16 : vector<8x4xf32>
    %cst_15 = arith.constant dense<0.000000e+00> : vector<4xf32>
    %18 = vector.multi_reduction <add>, %17, %cst_15 [0] : vector<8x4xf32> to vector<4xf32>
    %19 = vector.shape_cast %18 : vector<4xf32> to vector<1x4xf32>
    %cst_16 = arith.constant 0.000000e+00 : f32
    %20 = vector.broadcast %cst_16 : f32 to vector<1x4xf32>
    %21 = arith.maximumf %19, %20 : vector<1x4xf32>
    %c0_17 = arith.constant 0 : index
    %c0_18 = arith.constant 0 : index
    %22 = vector.load %arg3[%c0_17, %c0_18] : memref<8x4xf32, #tpu.memory_space<vmem>>, vector<8x4xf32>
    %23 = vector.broadcast %21 : vector<1x4xf32> to vector<8x4xf32>
    %24 = arith.mulf %22, %23 : vector<8x4xf32>
    %cst_19 = arith.constant dense<0.000000e+00> : vector<8xf32>
    %25 = vector.multi_reduction <add>, %24, %cst_19 [1] : vector<8x4xf32> to vector<8xf32>
    %26 = vector.shape_cast %25 : vector<8xf32> to vector<8x1xf32>
    %27 = arith.negf %26 : vector<8x1xf32>
    %28 = math.exp %27 : vector<8x1xf32>
    %cst_20 = arith.constant 1.000000e+00 : f32
    %29 = vector.broadcast %cst_20 : f32 to vector<8x1xf32>
    %30 = arith.addf %29, %28 : vector<8x1xf32>
    %31 = arith.divf %29, %30 : vector<8x1xf32>
    %c0_21 = arith.constant 0 : index
    %c0_22 = arith.constant 0 : index
    %c0_23 = arith.constant 0 : index
    %c0_24 = arith.constant 0 : index
    %32 = vector.load %arg1[%c0_21, %c0_22, %c0_23, %c0_24] : memref<1x4x8x256xf32, #tpu.memory_space<vmem>>, vector<1x1x8x256xf32>
    %33 = vector.shape_cast %32 : vector<1x1x8x256xf32> to vector<8x256xf32>
    %34 = vector.broadcast %31 : vector<8x1xf32> to vector<8x256xf32>
    %35 = arith.mulf %33, %34 : vector<8x256xf32>
    %c0_25 = arith.constant 0 : index
    %c0_26 = arith.constant 0 : index
    %c0_27 = arith.constant 0 : index
    %c0_28 = arith.constant 0 : index
    %36 = vector.load %arg4[%c0_25, %c0_26, %c0_27, %c0_28] : memref<1x4x8x256xf32, #tpu.memory_space<vmem>>, vector<1x1x8x256xf32>
    %37 = vector.shape_cast %36 : vector<1x1x8x256xf32> to vector<8x256xf32>
    %38 = vector.shape_cast %35 : vector<8x256xf32> to vector<1x1x8x256xf32>
    tpu.vector_store %arg4[%c0_25, %c0_26, %c0_27, %c0_28], %38 {strides = array<i32>} : memref<1x4x8x256xf32, #tpu.memory_space<vmem>>, vector<1x1x8x256xf32>,
    %c0_29 = arith.constant 0 : index
    %c1_30 = arith.constant 1 : index
    %c0_31 = arith.constant 0 : index
    %c0_32 = arith.constant 0 : index
    %39 = vector.load %arg1[%c0_29, %c1_30, %c0_31, %c0_32] : memref<1x4x8x256xf32, #tpu.memory_space<vmem>>, vector<1x1x8x256xf32>
    %40 = vector.shape_cast %39 : vector<1x1x8x256xf32> to vector<8x256xf32>
    %41 = vector.broadcast %31 : vector<8x1xf32> to vector<8x256xf32>
    %42 = arith.mulf %40, %41 : vector<8x256xf32>
    %c0_33 = arith.constant 0 : index
    %c1_34 = arith.constant 1 : index
    %c0_35 = arith.constant 0 : index
    %c0_36 = arith.constant 0 : index
    %43 = vector.load %arg4[%c0_33, %c1_34, %c0_35, %c0_36] : memref<1x4x8x256xf32, #tpu.memory_space<vmem>>, vector<1x1x8x256xf32>
    %44 = vector.shape_cast %43 : vector<1x1x8x256xf32> to vector<8x256xf32>
    %45 = vector.shape_cast %42 : vector<8x256xf32> to vector<1x1x8x256xf32>
    tpu.vector_store %arg4[%c0_33, %c1_34, %c0_35, %c0_36], %45 {strides = array<i32>} : memref<1x4x8x256xf32, #tpu.memory_space<vmem>>, vector<1x1x8x256xf32>,
    %c0_37 = arith.constant 0 : index
    %c2_38 = arith.constant 2 : index
    %c0_39 = arith.constant 0 : index
    %c0_40 = arith.constant 0 : index
    %46 = vector.load %arg1[%c0_37, %c2_38, %c0_39, %c0_40] : memref<1x4x8x256xf32, #tpu.memory_space<vmem>>, vector<1x1x8x256xf32>
    %47 = vector.shape_cast %46 : vector<1x1x8x256xf32> to vector<8x256xf32>
    %48 = vector.broadcast %31 : vector<8x1xf32> to vector<8x256xf32>
    %49 = arith.mulf %47, %48 : vector<8x256xf32>
    %c0_41 = arith.constant 0 : index
    %c2_42 = arith.constant 2 : index
    %c0_43 = arith.constant 0 : index
    %c0_44 = arith.constant 0 : index
    %50 = vector.load %arg4[%c0_41, %c2_42, %c0_43, %c0_44] : memref<1x4x8x256xf32, #tpu.memory_space<vmem>>, vector<1x1x8x256xf32>
    %51 = vector.shape_cast %50 : vector<1x1x8x256xf32> to vector<8x256xf32>
    %52 = vector.shape_cast %49 : vector<8x256xf32> to vector<1x1x8x256xf32>
    tpu.vector_store %arg4[%c0_41, %c2_42, %c0_43, %c0_44], %52 {strides = array<i32>} : memref<1x4x8x256xf32, #tpu.memory_space<vmem>>, vector<1x1x8x256xf32>,
    %c0_45 = arith.constant 0 : index
    %c3_46 = arith.constant 3 : index
    %c0_47 = arith.constant 0 : index
    %c0_48 = arith.constant 0 : index
    %53 = vector.load %arg1[%c0_45, %c3_46, %c0_47, %c0_48] : memref<1x4x8x256xf32, #tpu.memory_space<vmem>>, vector<1x1x8x256xf32>
    %54 = vector.shape_cast %53 : vector<1x1x8x256xf32> to vector<8x256xf32>
    %55 = vector.broadcast %31 : vector<8x1xf32> to vector<8x256xf32>
    %56 = arith.mulf %54, %55 : vector<8x256xf32>
    %c0_49 = arith.constant 0 : index
    %c3_50 = arith.constant 3 : index
    %c0_51 = arith.constant 0 : index
    %c0_52 = arith.constant 0 : index
    %57 = vector.load %arg4[%c0_49, %c3_50, %c0_51, %c0_52] : memref<1x4x8x256xf32, #tpu.memory_space<vmem>>, vector<1x1x8x256xf32>
    %58 = vector.shape_cast %57 : vector<1x1x8x256xf32> to vector<8x256xf32>
    %59 = vector.shape_cast %56 : vector<8x256xf32> to vector<1x1x8x256xf32>
    tpu.vector_store %arg4[%c0_49, %c3_50, %c0_51, %c0_52], %59 {strides = array<i32>} : memref<1x4x8x256xf32, #tpu.memory_space<vmem>>, vector<1x1x8x256xf32>,
    return
  }
  func.func @transform_0(%arg0: i32) -> (i32, i32, i32, i32) {
    %c0_i32 = arith.constant 0 : i32
    %c0_i32_0 = arith.constant 0 : i32
    %c0_i32_1 = arith.constant 0 : i32
    %c0_i32_2 = arith.constant 0 : i32
    return %arg0, %c0_i32, %c0_i32_0, %c0_i32_1 : i32, i32, i32, i32
  }
  func.func @transform_1(%arg0: i32) -> (i32, i32) {
    %c0_i32 = arith.constant 0 : i32
    %c0_i32_0 = arith.constant 0 : i32
    %c0_i32_1 = arith.constant 0 : i32
    return %c0_i32, %c0_i32_0 : i32, i32
  }
  func.func @transform_2(%arg0: i32) -> (i32, i32) {
    %c0_i32 = arith.constant 0 : i32
    %c0_i32_0 = arith.constant 0 : i32
    %c0_i32_1 = arith.constant 0 : i32
    return %c0_i32, %c0_i32_0 : i32, i32
  }
  func.func @transform_3(%arg0: i32) -> (i32, i32, i32, i32) {
    %c0_i32 = arith.constant 0 : i32
    %c0_i32_0 = arith.constant 0 : i32
    %c0_i32_1 = arith.constant 0 : i32
    %c0_i32_2 = arith.constant 0 : i32
    return %arg0, %c0_i32, %c0_i32_0, %c0_i32_1 : i32, i32, i32, i32
  }
}

</mosaic_0001>

<llo_original>
// kernel: se_layer_pallas.1
$region0: #{se_layer_pallas.1}
  #allocation0 [shape = 'u32[]', space=smem, size = 0x4, offset = 0x4, fixed_abs, tag = 'smem constant byte address 0x4 - core index']
  #allocation1 [shape = 'u32[72,128]{1,0:T(1,128)}', space=vmem, size = 0x9000, scoped, tag = 'internal scratch']
  %s0 = inlined_call_operand.vmem [shape: f32[2,4,8,256], index: 0, kind: input, shape index: {}]
  %s1 = inlined_call_operand.vmem [shape: f32[8,4], index: 1, kind: input, shape index: {}]
  %s2 = inlined_call_operand.vmem [shape: f32[8,4], index: 2, kind: input, shape index: {}]
  %s3 = inlined_call_operand.vmem [shape: f32[2,4,8,256], index: 3, kind: output, shape index: {}]
  %s4 = sld [smem:[#allocation0]]
  $region45: #{se_layer_pallas.1} parent=0
    _
  %s6 = ssub.s32 1, %s4
  %s7 = scalar_select 0, %s6, %s4
  loop: start=0, step=1, limit=4
  $region2: #{se_layer_pallas.1} parent=0 // loop_pre_header
    _
  $region3: #{se_layer_pallas.1} parent=0 // loop_header
    %s9 = sphi 0, %s13
    %p10 = scmp.ge.s32.totalorder %s9, 4
    %s19 = sphi 0, %s21
    %s22 = sphi 0, %s19
    %s23 = sphi 0, %s22
    %s39 = sphi 0, %s23
    %s43 = sphi 0, %s43
    %s45 = sphi 0, %s43
    %s46 = sphi 0, %s45
    %s60 = sphi 0, %s46
    %s64 = sphi 0, %s64
    %s66 = sphi 0, %s64
    %s67 = sphi 0, %s66
    %s81 = sphi 0, %s67
    %s87 = sphi 0, %s89
    %s90 = sphi 0, %s87
    %s91 = sphi 0, %s90
    %s107 = sphi 0, %s91
  $region4: #{se_layer_pallas.1} parent=0 // loop_header_branch
    %12 = sbr.rel (%p10) target = $region8
  $region5: #{se_layer_pallas.1} parent=0 // loop_body
    %s14 = ssub.s32 %s9, 1
    %s15 = ssub.s32 %s9, 2
    %s16 = sadd.s32 %s9, 1
    %s17 = ssub.s32 %s9, %s16
    %p18 = scmp.eq.s32.totalorder %s17, 0
    %s20 = sadd.s32 %s19, 1
    %s21 = scalar_select %p18, %s19, %s20
    %p24 = pneg %p18
    %p25 = scmp.eq.s32.totalorder %s9, 1
    %p26 = por %p24, %p25
    %p27 = scmp.ne.s32.totalorder %s19, %s22
    %p28 = scmp.eq.s32.totalorder %s9, 0
    %p29 = por %p27, %p28
    %p30 = scmp.ne.s32.totalorder %s19, %s22
    %p31 = scmp.eq.s32.totalorder %s14, 1
    %p32 = por %p30, %p31
    %p33 = scmp.ne.s32.totalorder %s22, %s23
    %p34 = scmp.eq.s32.totalorder %s14, 0
    %p35 = por %p33, %p34
    %p36 = scmp.ne.s32.totalorder %s22, %s23
    %p37 = scmp.eq.s32.totalorder %s15, 1
    %p38 = por %p36, %p37
    %p40 = scmp.ne.s32.totalorder %s23, %s39
    %p41 = scmp.eq.s32.totalorder %s15, 0
    %p42 = por %p40, %p41
    %s44 = sadd.s32 %s43, 1
    %p47 = scmp.eq.s32.totalorder %s9, 1
    %p48 = scmp.ne.s32.totalorder %s43, %s45
    %p49 = scmp.eq.s32.totalorder %s9, 0
    %p50 = por %p48, %p49
    %p51 = scmp.ne.s32.totalorder %s43, %s45
    %p52 = scmp.eq.s32.totalorder %s14, 1
    %p53 = por %p51, %p52
    %p54 = scmp.ne.s32.totalorder %s45, %s46
    %p55 = scmp.eq.s32.totalorder %s14, 0
    %p56 = por %p54, %p55
    %p57 = scmp.ne.s32.totalorder %s45, %s46
    %p58 = scmp.eq.s32.totalorder %s15, 1
    %p59 = por %p57, %p58
    %p61 = scmp.ne.s32.totalorder %s46, %s60
    %p62 = scmp.eq.s32.totalorder %s15, 0
    %p63 = por %p61, %p62
    %s65 = sadd.s32 %s64, 1
    %p68 = scmp.eq.s32.totalorder %s9, 1
    %p69 = scmp.ne.s32.totalorder %s64, %s66
    %p70 = scmp.eq.s32.totalorder %s9, 0
    %p71 = por %p69, %p70
    %p72 = scmp.ne.s32.totalorder %s64, %s66
    %p73 = scmp.eq.s32.totalorder %s14, 1
    %p74 = por %p72, %p73
    %p75 = scmp.ne.s32.totalorder %s66, %s67
    %p76 = scmp.eq.s32.totalorder %s14, 0
    %p77 = por %p75, %p76
    %p78 = scmp.ne.s32.totalorder %s66, %s67
    %p79 = scmp.eq.s32.totalorder %s15, 1
    %p80 = por %p78, %p79
    %p82 = scmp.ne.s32.totalorder %s67, %s81
    %p83 = scmp.eq.s32.totalorder %s15, 0
    %p84 = por %p82, %p83
    %s85 = ssub.s32 %s9, %s16
    %p86 = scmp.eq.s32.totalorder %s85, 0
    %s88 = sadd.s32 %s87, 1
    %s89 = scalar_select %p86, %s87, %s88
    %p92 = pneg %p86
    %p93 = scmp.eq.s32.totalorder %s9, 1
    %p94 = por %p92, %p93
    %p95 = scmp.ne.s32.totalorder %s87, %s90
    %p96 = scmp.eq.s32.totalorder %s9, 0
    %p97 = por %p95, %p96
    %p98 = scmp.ne.s32.totalorder %s87, %s90
    %p99 = scmp.eq.s32.totalorder %s14, 1
    %p100 = por %p98, %p99
    %p101 = scmp.ne.s32.totalorder %s90, %s91
    %p102 = scmp.eq.s32.totalorder %s14, 0
    %p103 = por %p101, %p102
    %p104 = scmp.ne.s32.totalorder %s90, %s91
    %p105 = scmp.eq.s32.totalorder %s15, 1
    %p106 = por %p104, %p105
    %p108 = scmp.ne.s32.totalorder %s91, %s107
    %p109 = scmp.eq.s32.totalorder %s15, 0
    %p110 = por %p108, %p109
    %p111 = scmp.le.s32.totalorder 1, %s9
    %p112 = scmp.lt.s32.totalorder %s9, 3
    %p113 = pnand %p111, %p112
    %p114 = pneg %p113
    // Predicated region
    $region9: #{se_layer_pallas.1} parent=5 // pred_check
      _
    $region10: #{se_layer_pallas.1} parent=5 // pred_check_branch
      %116 = sbr.rel (%p113) target = $region12
    $region11: #{se_layer_pallas.1} parent=5 // pred_region
      %s117 = ssub.s32 %s9, 1
      // Predicated region
      $region13: #{se_layer_pallas.1} parent=11 // pred_check
        %p118 = pneg %p56
      $region14: #{se_layer_pallas.1} parent=11 // pred_check_branch
        %120 = sbr.rel (%p118) target = $region16
      $region15: #{se_layer_pallas.1} parent=11 // pred_region
        _
      $region16: #{se_layer_pallas.1} parent=11 // pred_fallthru
        _
      // Predicated region
      $region17: #{se_layer_pallas.1} parent=11 // pred_check
        %p121 = pneg %p77
      $region18: #{se_layer_pallas.1} parent=11 // pred_check_branch
        %123 = sbr.rel (%p121) target = $region20
      $region19: #{se_layer_pallas.1} parent=11 // pred_region
        _
      $region20: #{se_layer_pallas.1} parent=11 // pred_fallthru
        _
    $region12: #{se_layer_pallas.1} parent=5 // pred_fallthru
      _
    %p124 = scmp.lt.s32.totalorder %s9, 2
    // Predicated region
    $region21: #{se_layer_pallas.1} parent=5 // pred_check
      %p125 = pneg %p124
    $region22: #{se_layer_pallas.1} parent=5 // pred_check_branch
      %127 = sbr.rel (%p125) target = $region24
    $region23: #{se_layer_pallas.1} parent=5 // pred_region
      // Predicated region
      $region25: #{se_layer_pallas.1} parent=23 // pred_check
        %p128 = pneg %p29
      $region26: #{se_layer_pallas.1} parent=23 // pred_check_branch
        %130 = sbr.rel (%p128) target = $region28
      $region27: #{se_layer_pallas.1} parent=23 // pred_region
        %p131 = scmp.lt.s32.totalorder %s9, 1
        %s132 = scalar_select %p131, %s9, 1
        %s133 = smul.addr %s132, 8
        %s134 = smul.addr %s133, 8
        %s135 = scalar_lea.vmem %s0, %s134
      $region28: #{se_layer_pallas.1} parent=23 // pred_fallthru
        _
    $region24: #{se_layer_pallas.1} parent=5 // pred_fallthru
      _
    %p136 = scmp.le.s32.totalorder 1, %s9
    %p137 = scmp.lt.s32.totalorder %s9, 3
    %p138 = pnand %p136, %p137
    %p139 = pneg %p138
    // Predicated region
    $region29: #{se_layer_pallas.1} parent=5 // pred_check
      _
    $region30: #{se_layer_pallas.1} parent=5 // pred_check_branch
      %141 = sbr.rel (%p138) target = $region32
    $region31: #{se_layer_pallas.1} parent=5 // pred_region
      %s142 = ssub.s32 %s9, 1
      %p143 = scmp.lt.s32.totalorder %s14, 1
      %s144 = scalar_select %p143, %s14, 1
      %s145 = smul.addr %s144, 8
      %s146 = smul.addr %s145, 8
      %s147 = scalar_lea.vmem %s0, %s146
      %p148 = pneg %p35
      %p149 = pneg %p32
      %p150 = pneg %p56
      %p151 = pneg %p53
      %p152 = pneg %p77
      %p153 = pneg %p74
      %p154 = pneg %p103
      %p155 = pneg %p100
      %p156 = scmp.lt.s32.totalorder %s14, 1
      %s157 = scalar_select %p156, %s14, 1
      %s158 = smul.addr %s157, 8
      %s159 = smul.addr %s158, 8
      %s160 = scalar_lea.vmem %s3, %s159
      %p161 = scmp.lt.s32.totalorder %s14, 1
      %s162 = scalar_select %p161, %s14, 1
      %s163 = smul.addr %s162, 8
      %s164 = smul.addr %s163, 8
      %s165 = scalar_lea.vmem %s0, %s164
      %p166 = scmp.lt.s32.totalorder %s14, 1
      %s167 = scalar_select %p166, %s14, 1
      %s168 = smul.addr %s167, 8
      %s169 = smul.addr %s168, 8
      %s170 = scalar_lea.vmem %s3, %s169
      %v171 = vld [vmem:[%s165] sm:$0xff]
      %v172 = vld [vmem:[%s165 + $0x8] sm:$0xff]
      %s173 = scalar_lea.vmem %s165, 16
      %v174 = vld [vmem:[%s173] sm:$0xff]
      %v175 = vld [vmem:[%s173 + $0x8] sm:$0xff]
      %v176 = vadd.f32 %v171, %v174
      %v177 = vadd.f32 %v172, %v175
      %s178 = scalar_lea.vmem %s165, 32
      %v179 = vld [vmem:[%s178] sm:$0xff]
      %v180 = vld [vmem:[%s178 + $0x8] sm:$0xff]
      %v181 = vadd.f32 %v176, %v179
      %v182 = vadd.f32 %v177, %v180
      %s183 = scalar_lea.vmem %s165, 48
      %v184 = vld [vmem:[%s183] sm:$0xff]
      %v185 = vld [vmem:[%s183 + $0x8] sm:$0xff]
      %v186 = vadd.f32 %v181, %v184
      %v187 = vadd.f32 %v182, %v185
      %v188 = vadd.f32 %v186, %v187
      %189 = vadd.xlane.f32.xlu0 %v188
      %v190 = vpop.xlane.xlu0 %189
      %v191 = vmul.f32 %v190, 0.0009765625
      %v192 = vld [vmem:[%s1] sm:$0xff]
      %v193 = vmul.f32 %v192, %v191
      %vm194 = vcmask 31744
      %v195 = vsel %vm194, %v193, 0.0
      %v196 = vrot.slane %v195, 4
      %v197 = vadd.f32 %v195, %v196
      %v198 = vrot.slane %v197, 2
      %v199 = vadd.f32 %v197, %v198
      %v200 = vrot.slane %v199, 1
      %v201 = vadd.f32 %v199, %v200
      %v202 = vmax.f32 %v201, 0.0
      %v203 = vld [vmem:[%s2] sm:$0xff]
      %v204 = vmul.f32 %v203, %v202
      %v205 = vsel %vm194, %v204, 0.0
      %206 = vadd.xlane.f32.xlu0 %v205
      %v207 = vpop.xlane.xlu0 %206
      %v208 = vxor.u32 %v207, 2147483648
      %v209 = vmul.f32 %v208, 1.442695
      %v210 = vpow.pop %v209
      %v211 = vadd.f32 %v210, 1.0
      %v212 = vrcp.pop %v211
      %v213 = vmul.f32 %v211, %v212
      %v214 = vsub.f32 1.0, %v213
      %v215 = vmul.f32 %v212, %v214
      %v216 = vadd.f32 %v212, %v215
      %vm217 = vweird.f32 %v211
      %vm218 = vweird.f32 %v212
      %vm219 = vmor %vm217, %vm218
      %v220 = vsel %vm219, %v212, %v216
      %v221 = vand.u32 2147483647, %v211
      %vm222 = vcmp.eq.f32.partialorder %v221, 8.507059e+37
      %v223 = vand.u32 %v211, 2147483648
      %v224 = vor.u32 1.1754944e-38, %v223
      %v225 = vsel %vm222, %v224, %v220
      %v226 = vmul.f32 1.0, %v225
      %v227 = vmul.f32 %v171, %v226
      %v228 = vmul.f32 %v172, %v226
      %229 = vst [vmem:[%s170] sm:$0xff] %v227
      %230 = vst [vmem:[%s170 + $0x8] sm:$0xff] %v228
      %v231 = vld [vmem:[%s173] sm:$0xff]
      %v232 = vld [vmem:[%s173 + $0x8] sm:$0xff]
      %v233 = vmul.f32 %v231, %v226
      %v234 = vmul.f32 %v232, %v226
      %s235 = scalar_lea.vmem %s170, 16
      %236 = vst [vmem:[%s235] sm:$0xff] %v233
      %237 = vst [vmem:[%s235 + $0x8] sm:$0xff] %v234
      %v238 = vld [vmem:[%s178] sm:$0xff]
      %v239 = vld [vmem:[%s178 + $0x8] sm:$0xff]
      %v240 = vmul.f32 %v238, %v226
      %v241 = vmul.f32 %v239, %v226
      %s242 = scalar_lea.vmem %s170, 32
      %243 = vst [vmem:[%s242] sm:$0xff] %v240
      %244 = vst [vmem:[%s242 + $0x8] sm:$0xff] %v241
      %v245 = vld [vmem:[%s183] sm:$0xff]
      %v246 = vld [vmem:[%s183 + $0x8] sm:$0xff]
      %v247 = vmul.f32 %v245, %v226
      %v248 = vmul.f32 %v246, %v226
      %s249 = scalar_lea.vmem %s170, 48
      %250 = vst [vmem:[%s249] sm:$0xff] %v247
      %251 = vst [vmem:[%s249 + $0x8] sm:$0xff] %v248
      %p252 = scmp.lt.s32.totalorder %s14, 1
      %s253 = scalar_select %p252, %s14, 1
      %s254 = smul.addr %s253, 8
      %s255 = smul.addr %s254, 8
      %s256 = scalar_lea.vmem %s3, %s255
      // Predicated region
      $region33: #{se_layer_pallas.1} parent=31 // pred_check
        %p257 = pneg %p100
      $region34: #{se_layer_pallas.1} parent=31 // pred_check_branch
        %259 = sbr.rel (%p257) target = $region36
      $region35: #{se_layer_pallas.1} parent=31 // pred_region
        _
      $region36: #{se_layer_pallas.1} parent=31 // pred_fallthru
        _
    $region32: #{se_layer_pallas.1} parent=5 // pred_fallthru
      _
    %p260 = scmp.le.s32.totalorder 2, %s9
    // Predicated region
    $region37: #{se_layer_pallas.1} parent=5 // pred_check
      %p261 = pneg %p260
    $region38: #{se_layer_pallas.1} parent=5 // pred_check_branch
      %263 = sbr.rel (%p261) target = $region40
    $region39: #{se_layer_pallas.1} parent=5 // pred_region
      %s264 = ssub.s32 %s9, 2
      // Predicated region
      $region41: #{se_layer_pallas.1} parent=39 // pred_check
        %p265 = pneg %p106
      $region42: #{se_layer_pallas.1} parent=39 // pred_check_branch
        %267 = sbr.rel (%p265) target = $region44
      $region43: #{se_layer_pallas.1} parent=39 // pred_region
        %p268 = scmp.lt.s32.totalorder %s15, 1
        %s269 = scalar_select %p268, %s15, 1
        %s270 = smul.addr %s269, 8
        %s271 = smul.addr %s270, 8
        %s272 = scalar_lea.vmem %s3, %s271
      $region44: #{se_layer_pallas.1} parent=39 // pred_fallthru
        _
    $region40: #{se_layer_pallas.1} parent=5 // pred_fallthru
      _
  $region6: #{se_layer_pallas.1} parent=0 // loop_footer
    %s13 = sadd.s32 1, %s9
  $region7: #{se_layer_pallas.1} parent=0 // loop_footer_branch
    %8 = sbr.rel target = $region3
  $region8: #{se_layer_pallas.1} parent=0 // loop_exit
    _

</llo_original>
